<compile_context>
chip_gen: v6e
topology: v6e:2x2x1
jax: 0.10.0
libtpu: 0.0.40
codegen_flags: <defaults>
</compile_context>

<pallas_src>
import functools

import jax
import jax.numpy as jnp
from jax import lax
from jax.experimental import pallas as pl
from jax.experimental.pallas import tpu as pltpu

P_DROP = 0.5
DIMS = [(2, 10), (10, 8), (8, 5), (5, 2)]  # (in, out) per layer


def _round_up(n, m):
    return ((n + m - 1) // m) * m


def _dropout(h, salt_u32, p):
    """Training-mode dropout (inverted scaling) from a counter-based hash."""
    if p <= 0.0:
        return h
    if p >= 1.0:
        return jnp.zeros_like(h)
    rows, cols = h.shape
    lin = (lax.broadcasted_iota(jnp.int32, (rows, cols), 0) * cols
           + lax.broadcasted_iota(jnp.int32, (rows, cols), 1)).astype(jnp.uint32)
    bits = lin ^ salt_u32
    # murmur3-style finalizer -> well-mixed 32 random bits per element
    bits = (bits ^ (bits >> jnp.uint32(16))) * jnp.uint32(0x7FEB352D)
    bits = (bits ^ (bits >> jnp.uint32(15))) * jnp.uint32(0x846CA68B)
    bits = bits ^ (bits >> jnp.uint32(16))
    # integer-space keep test: P(keep) = 1 - p
    thresh = jnp.uint32(min(int((1.0 - p) * 4294967296.0), 4294967295))
    keep = bits < thresh
    scale = jnp.float32(1.0 / (1.0 - p))
    return jnp.where(keep, h * scale, jnp.float32(0.0))


def _linear_vpu(h, w_ref, b_ref):
    """y = W @ h + b via unrolled VPU broadcast-FMA (no MXU).

    h: (in, TB) f32,  w_ref: (out, in),  b_ref: (out, 1)  ->  (out, TB) f32.
    """
    w = w_ref[...].astype(jnp.float32)
    in_dim = w.shape[1]
    acc = None
    for k in range(in_dim):  # in_dim <= 10, fully unrolled at trace time
        term = w[:, k:k + 1] * h[k:k + 1, :]          # (out,1)*(1,TB) -> (out,TB)
        acc = term if acc is None else acc + term
    return acc + b_ref[...].astype(jnp.float32)        # (out,1) lane-broadcast


def mlp_kernel(seed_ref,                                # scalar prefetch (SMEM)
               x_ref,
               w1_ref, b1_ref, w2_ref, b2_ref,
               w3_ref, b3_ref, w4_ref, b4_ref,
               o_ref,
               *, p, training):
    h = x_ref[...].astype(jnp.float32)                  # (2, TB)

    use_dropout = training and p > 0.0
    if use_dropout:
        tile = pl.program_id(0).astype(jnp.uint32)
        base = seed_ref[0].astype(jnp.uint32)
        # per-tile salt so every batch tile gets an independent mask
        salt0 = base * jnp.uint32(0x9E3779B9) + tile * jnp.uint32(0x85EBCA77)

    def layer(h, w_ref, b_ref, idx, relu, drop):
        y = _linear_vpu(h, w_ref, b_ref)
        if relu:
            y = jnp.maximum(y, 0.0)
        if drop and use_dropout:
            salt = salt0 + jnp.uint32(idx) * jnp.uint32(0xC2B2AE3D)
            y = _dropout(y, salt, p)
        return y

    h = layer(h, w1_ref, b1_ref, 1, relu=True, drop=True)
    h = layer(h, w2_ref, b2_ref, 2, relu=True, drop=True)
    h = layer(h, w3_ref, b3_ref, 3, relu=True, drop=True)
    h = layer(h, w4_ref, b4_ref, 4, relu=False, drop=False)

    o_ref[...] = h.astype(o_ref.dtype)                  # (2, TB) lane-dense store


def mlp_forward(x, params, *, seed=0, p=P_DROP, training=True, block_b=512):
    """x: (B, 2) float32. params: w{i} of shape (out, in), b{i} of shape (out, 1)."""
    B = x.shape[0]
    in_dim = DIMS[0][0]
    out_dim = DIMS[-1][1]

    # batch on lanes: tile must be a multiple of 128
    tb = min(_round_up(block_b, 128), _round_up(B, 128))
    b_pad = _round_up(B, tb)
    n_tiles = b_pad // tb

    xt = jnp.pad(x.T.astype(jnp.float32), ((0, 0), (0, b_pad - B)))  # (2, B_pad)
    seed_arr = jnp.asarray([seed], dtype=jnp.int32)

    w1, b1 = params["w1"], params["b1"]
    w2, b2 = params["w2"], params["b2"]
    w3, b3 = params["w3"], params["b3"]
    w4, b4 = params["w4"], params["b4"]

    def resident(arr):  # full block, never re-DMA'd across batch tiles
        return pl.BlockSpec(arr.shape, lambda i, seed_ref: (0,) * arr.ndim)

    kernel = functools.partial(mlp_kernel, p=p, training=training)

    out_t = pl.pallas_call(
        kernel,
        out_shape=jax.ShapeDtypeStruct((out_dim, b_pad), jnp.float32),
        grid_spec=pltpu.PrefetchScalarGridSpec(
            num_scalar_prefetch=1,
            grid=(n_tiles,),
            in_specs=[
                pl.BlockSpec((in_dim, tb), lambda i, seed_ref: (0, i)),
                resident(w1), resident(b1),
                resident(w2), resident(b2),
                resident(w3), resident(b3),
                resident(w4), resident(b4),
            ],
            out_specs=pl.BlockSpec((out_dim, tb), lambda i, seed_ref: (0, i)),
        ),
        compiler_params=pltpu.CompilerParams(
            dimension_semantics=("parallel",)),
    )(seed_arr, xt, w1, b1, w2, b2, w3, b3, w4, b4)

    return out_t[:, :B].T                               # (B, 2)


def init_params(key):
    """Kaiming-uniform-ish init; weights stored in PyTorch (out, in) layout."""
    params = {}
    for idx, (fan_in, fan_out) in enumerate(DIMS, start=1):
        key, kw, kb = jax.random.split(key, 3)
        bound = 1.0 / jnp.sqrt(fan_in)
        params[f"w{idx}"] = jax.random.uniform(
            kw, (fan_out, fan_in), jnp.float32, -bound, bound)
        params[f"b{idx}"] = jax.random.uniform(
            kb, (fan_out, 1), jnp.float32, -bound, bound)
    return params


def _reference(x, params):
    h = jnp.maximum(x @ params["w1"].T + params["b1"].T, 0.0)
    h = jnp.maximum(h @ params["w2"].T + params["b2"].T, 0.0)
    h = jnp.maximum(h @ params["w3"].T + params["b3"].T, 0.0)
    return h @ params["w4"].T + params["b4"].T


if __name__ == "__main__":
    key = jax.random.PRNGKey(0)
    key, kx = jax.random.split(key)
    params = init_params(key)

    # small demo batch
    B = 8
    x = jax.random.normal(kx, (B, 2), dtype=jnp.float32)

    # training-mode forward (dropout active, matches nn.Module default mode)
    out_train = jax.block_until_ready(mlp_forward(x, params, seed=1234, training=True))
    assert out_train.shape == (B, 2)
    assert bool(jnp.all(jnp.isfinite(out_train)))

    # eval-mode forward (dropout = identity) cross-checked against pure JAX
    out_eval = jax.block_until_ready(mlp_forward(x, params, training=False))
    assert jnp.allclose(out_eval, _reference(x, params), atol=1e-5, rtol=1e-5)

    # exercise the multi-tile (pipelined, padded) path as well
    key, kx2 = jax.random.split(key)
    B2 = 300
    x2 = jax.random.normal(kx2, (B2, 2), dtype=jnp.float32)
    out2 = jax.block_until_ready(
        mlp_forward(x2, params, training=False, block_b=128))  # grid = 3 tiles
    assert out2.shape == (B2, 2)
    assert jnp.allclose(out2, _reference(x2, params), atol=1e-5, rtol=1e-5)
    out2_train = jax.block_until_ready(
        mlp_forward(x2, params, seed=7, training=True, block_b=128))
    assert bool(jnp.all(jnp.isfinite(out2_train)))

    print("KERNEL_OK")
</pallas_src>

<mosaic_0001>
module attributes {stable_mosaic.version = 11 : i64} {
  func.func @mlp_kernel(%arg0: i32, %arg1: memref<1xi32, #tpu.memory_space<smem>>, %arg2: memref<2x128xf32, #tpu.memory_space<vmem>>, %arg3: memref<10x2xf32, #tpu.memory_space<vmem>>, %arg4: memref<10x1xf32, #tpu.memory_space<vmem>>, %arg5: memref<8x10xf32, #tpu.memory_space<vmem>>, %arg6: memref<8x1xf32, #tpu.memory_space<vmem>>, %arg7: memref<5x8xf32, #tpu.memory_space<vmem>>, %arg8: memref<5x1xf32, #tpu.memory_space<vmem>>, %arg9: memref<2x5xf32, #tpu.memory_space<vmem>>, %arg10: memref<2x1xf32, #tpu.memory_space<vmem>>, %arg11: memref<2x128xf32, #tpu.memory_space<vmem>>) attributes {dimension_semantics = [#tpu.dimension_semantics<parallel>], iteration_bounds = array<i64: 1>, scalar_prefetch = 1 : i64, scratch_operands = 0 : i64, tpu.core_type = #tpu.core_type<tc>, window_params = [{transform_indices = @transform_0, window_bounds = array<i64: 2, 128>}, {pipeline_mode = #tpu.pipeline_mode<synchronous>, transform_indices = @transform_1, window_bounds = array<i64: 10, 2>}, {pipeline_mode = #tpu.pipeline_mode<synchronous>, transform_indices = @transform_2, window_bounds = array<i64: 10, 1>}, {pipeline_mode = #tpu.pipeline_mode<synchronous>, transform_indices = @transform_3, window_bounds = array<i64: 8, 10>}, {pipeline_mode = #tpu.pipeline_mode<synchronous>, transform_indices = @transform_4, window_bounds = array<i64: 8, 1>}, {pipeline_mode = #tpu.pipeline_mode<synchronous>, transform_indices = @transform_5, window_bounds = array<i64: 5, 8>}, {pipeline_mode = #tpu.pipeline_mode<synchronous>, transform_indices = @transform_6, window_bounds = array<i64: 5, 1>}, {pipeline_mode = #tpu.pipeline_mode<synchronous>, transform_indices = @transform_7, window_bounds = array<i64: 2, 5>}, {pipeline_mode = #tpu.pipeline_mode<synchronous>, transform_indices = @transform_8, window_bounds = array<i64: 2, 1>}, {transform_indices = @transform_9, window_bounds = array<i64: 2, 128>}]} {
    %c0 = arith.constant 0 : index
    %c0_0 = arith.constant 0 : index
    %0 = vector.load %arg2[%c0, %c0_0] : memref<2x128xf32, #tpu.memory_space<vmem>>, vector<2x128xf32>
    %c0_1 = arith.constant 0 : index
    %1 = memref.load %arg1[%c0_1] : memref<1xi32, #tpu.memory_space<smem>>
    %c-1640531527_i32 = arith.constant -1640531527 : i32
    %2 = arith.muli %1, %c-1640531527_i32 : i32
    %c-2048144777_i32 = arith.constant -2048144777 : i32
    %3 = arith.muli %arg0, %c-2048144777_i32 : i32
    %4 = arith.addi %2, %3 : i32
    %c0_2 = arith.constant 0 : index
    %c0_3 = arith.constant 0 : index
    %5 = vector.load %arg3[%c0_2, %c0_3] : memref<10x2xf32, #tpu.memory_space<vmem>>, vector<10x2xf32>
    %6 = vector.extract_strided_slice %5 {offsets = [0, 0], sizes = [10, 1], strides = [1, 1]} : vector<10x2xf32> to vector<10x1xf32>
    %7 = vector.extract_strided_slice %0 {offsets = [0, 0], sizes = [1, 128], strides = [1, 1]} : vector<2x128xf32> to vector<1x128xf32>
    %8 = vector.broadcast %6 : vector<10x1xf32> to vector<10x128xf32>
    %9 = vector.broadcast %7 : vector<1x128xf32> to vector<10x128xf32>
    %10 = arith.mulf %8, %9 : vector<10x128xf32>
    %11 = vector.extract_strided_slice %5 {offsets = [0, 1], sizes = [10, 1], strides = [1, 1]} : vector<10x2xf32> to vector<10x1xf32>
    %12 = vector.extract_strided_slice %0 {offsets = [1, 0], sizes = [1, 128], strides = [1, 1]} : vector<2x128xf32> to vector<1x128xf32>
    %13 = vector.broadcast %11 : vector<10x1xf32> to vector<10x128xf32>
    %14 = vector.broadcast %12 : vector<1x128xf32> to vector<10x128xf32>
    %15 = arith.mulf %13, %14 : vector<10x128xf32>
    %16 = arith.addf %10, %15 : vector<10x128xf32>
    %c0_4 = arith.constant 0 : index
    %c0_5 = arith.constant 0 : index
    %17 = vector.load %arg4[%c0_4, %c0_5] : memref<10x1xf32, #tpu.memory_space<vmem>>, vector<10x1xf32>
    %18 = vector.broadcast %17 : vector<10x1xf32> to vector<10x128xf32>
    %19 = arith.addf %16, %18 : vector<10x128xf32>
    %cst = arith.constant 0.000000e+00 : f32
    %20 = vector.broadcast %cst : f32 to vector<10x128xf32>
    %21 = arith.maximumf %19, %20 : vector<10x128xf32>
    %c1_i32 = arith.constant 1 : i32
    %c-1028477379_i32 = arith.constant -1028477379 : i32
    %22 = arith.muli %c1_i32, %c-1028477379_i32 : i32
    %23 = arith.addi %4, %22 : i32
    %24 = tpu.iota {dimensions = array<i32: 0>} : vector<10x128xi32>
    %c128_i32 = arith.constant 128 : i32
    %25 = vector.broadcast %c128_i32 : i32 to vector<10x128xi32>
    %26 = arith.muli %24, %25 : vector<10x128xi32>
    %27 = tpu.iota {dimensions = array<i32: 1>} : vector<10x128xi32>
    %28 = arith.addi %26, %27 : vector<10x128xi32>
    %29 = vector.broadcast %23 : i32 to vector<10x128xi32>
    %30 = arith.xori %28, %29 : vector<10x128xi32>
    %c16_i32 = arith.constant 16 : i32
    %31 = vector.broadcast %c16_i32 : i32 to vector<10x128xi32>
    %32 = arith.shrui %30, %31 : vector<10x128xi32>
    %33 = arith.xori %30, %32 : vector<10x128xi32>
    %c2146121005_i32 = arith.constant 2146121005 : i32
    %34 = vector.broadcast %c2146121005_i32 : i32 to vector<10x128xi32>
    %35 = arith.muli %33, %34 : vector<10x128xi32>
    %c15_i32 = arith.constant 15 : i32
    %36 = vector.broadcast %c15_i32 : i32 to vector<10x128xi32>
    %37 = arith.shrui %35, %36 : vector<10x128xi32>
    %38 = arith.xori %35, %37 : vector<10x128xi32>
    %c-2073254261_i32 = arith.constant -2073254261 : i32
    %39 = vector.broadcast %c-2073254261_i32 : i32 to vector<10x128xi32>
    %40 = arith.muli %38, %39 : vector<10x128xi32>
    %c16_i32_6 = arith.constant 16 : i32
    %41 = vector.broadcast %c16_i32_6 : i32 to vector<10x128xi32>
    %42 = arith.shrui %40, %41 : vector<10x128xi32>
    %43 = arith.xori %40, %42 : vector<10x128xi32>
    %c-2147483648_i32 = arith.constant -2147483648 : i32
    %44 = vector.broadcast %c-2147483648_i32 : i32 to vector<10x128xi32>
    %45 = arith.cmpi ult, %43, %44 : vector<10x128xi32>
    %cst_7 = arith.constant 2.000000e+00 : f32
    %46 = vector.broadcast %cst_7 : f32 to vector<10x128xf32>
    %47 = arith.mulf %21, %46 : vector<10x128xf32>
    %cst_8 = arith.constant 0.000000e+00 : f32
    %48 = vector.broadcast %cst_8 : f32 to vector<10x128xf32>
    %49 = arith.select %45, %47, %48 : vector<10x128xi1>, vector<10x128xf32>
    %c0_9 = arith.constant 0 : index
    %c0_10 = arith.constant 0 : index
    %50 = vector.load %arg5[%c0_9, %c0_10] : memref<8x10xf32, #tpu.memory_space<vmem>>, vector<8x10xf32>
    %51 = vector.extract_strided_slice %50 {offsets = [0, 0], sizes = [8, 1], strides = [1, 1]} : vector<8x10xf32> to vector<8x1xf32>
    %52 = vector.extract_strided_slice %49 {offsets = [0, 0], sizes = [1, 128], strides = [1, 1]} : vector<10x128xf32> to vector<1x128xf32>
    %53 = vector.broadcast %51 : vector<8x1xf32> to vector<8x128xf32>
    %54 = vector.broadcast %52 : vector<1x128xf32> to vector<8x128xf32>
    %55 = arith.mulf %53, %54 : vector<8x128xf32>
    %56 = vector.extract_strided_slice %50 {offsets = [0, 1], sizes = [8, 1], strides = [1, 1]} : vector<8x10xf32> to vector<8x1xf32>
    %57 = vector.extract_strided_slice %49 {offsets = [1, 0], sizes = [1, 128], strides = [1, 1]} : vector<10x128xf32> to vector<1x128xf32>
    %58 = vector.broadcast %56 : vector<8x1xf32> to vector<8x128xf32>
    %59 = vector.broadcast %57 : vector<1x128xf32> to vector<8x128xf32>
    %60 = arith.mulf %58, %59 : vector<8x128xf32>
    %61 = arith.addf %55, %60 : vector<8x128xf32>
    %62 = vector.extract_strided_slice %50 {offsets = [0, 2], sizes = [8, 1], strides = [1, 1]} : vector<8x10xf32> to vector<8x1xf32>
    %63 = vector.extract_strided_slice %49 {offsets = [2, 0], sizes = [1, 128], strides = [1, 1]} : vector<10x128xf32> to vector<1x128xf32>
    %64 = vector.broadcast %62 : vector<8x1xf32> to vector<8x128xf32>
    %65 = vector.broadcast %63 : vector<1x128xf32> to vector<8x128xf32>
    %66 = arith.mulf %64, %65 : vector<8x128xf32>
    %67 = arith.addf %61, %66 : vector<8x128xf32>
    %68 = vector.extract_strided_slice %50 {offsets = [0, 3], sizes = [8, 1], strides = [1, 1]} : vector<8x10xf32> to vector<8x1xf32>
    %69 = vector.extract_strided_slice %49 {offsets = [3, 0], sizes = [1, 128], strides = [1, 1]} : vector<10x128xf32> to vector<1x128xf32>
    %70 = vector.broadcast %68 : vector<8x1xf32> to vector<8x128xf32>
    %71 = vector.broadcast %69 : vector<1x128xf32> to vector<8x128xf32>
    %72 = arith.mulf %70, %71 : vector<8x128xf32>
    %73 = arith.addf %67, %72 : vector<8x128xf32>
    %74 = vector.extract_strided_slice %50 {offsets = [0, 4], sizes = [8, 1], strides = [1, 1]} : vector<8x10xf32> to vector<8x1xf32>
    %75 = vector.extract_strided_slice %49 {offsets = [4, 0], sizes = [1, 128], strides = [1, 1]} : vector<10x128xf32> to vector<1x128xf32>
    %76 = vector.broadcast %74 : vector<8x1xf32> to vector<8x128xf32>
    %77 = vector.broadcast %75 : vector<1x128xf32> to vector<8x128xf32>
    %78 = arith.mulf %76, %77 : vector<8x128xf32>
    %79 = arith.addf %73, %78 : vector<8x128xf32>
    %80 = vector.extract_strided_slice %50 {offsets = [0, 5], sizes = [8, 1], strides = [1, 1]} : vector<8x10xf32> to vector<8x1xf32>
    %81 = vector.extract_strided_slice %49 {offsets = [5, 0], sizes = [1, 128], strides = [1, 1]} : vector<10x128xf32> to vector<1x128xf32>
    %82 = vector.broadcast %80 : vector<8x1xf32> to vector<8x128xf32>
    %83 = vector.broadcast %81 : vector<1x128xf32> to vector<8x128xf32>
    %84 = arith.mulf %82, %83 : vector<8x128xf32>
    %85 = arith.addf %79, %84 : vector<8x128xf32>
    %86 = vector.extract_strided_slice %50 {offsets = [0, 6], sizes = [8, 1], strides = [1, 1]} : vector<8x10xf32> to vector<8x1xf32>
    %87 = vector.extract_strided_slice %49 {offsets = [6, 0], sizes = [1, 128], strides = [1, 1]} : vector<10x128xf32> to vector<1x128xf32>
    %88 = vector.broadcast %86 : vector<8x1xf32> to vector<8x128xf32>
    %89 = vector.broadcast %87 : vector<1x128xf32> to vector<8x128xf32>
    %90 = arith.mulf %88, %89 : vector<8x128xf32>
    %91 = arith.addf %85, %90 : vector<8x128xf32>
    %92 = vector.extract_strided_slice %50 {offsets = [0, 7], sizes = [8, 1], strides = [1, 1]} : vector<8x10xf32> to vector<8x1xf32>
    %93 = vector.extract_strided_slice %49 {offsets = [7, 0], sizes = [1, 128], strides = [1, 1]} : vector<10x128xf32> to vector<1x128xf32>
    %94 = vector.broadcast %92 : vector<8x1xf32> to vector<8x128xf32>
    %95 = vector.broadcast %93 : vector<1x128xf32> to vector<8x128xf32>
    %96 = arith.mulf %94, %95 : vector<8x128xf32>
    %97 = arith.addf %91, %96 : vector<8x128xf32>
    %98 = vector.extract_strided_slice %50 {offsets = [0, 8], sizes = [8, 1], strides = [1, 1]} : vector<8x10xf32> to vector<8x1xf32>
    %99 = vector.extract_strided_slice %49 {offsets = [8, 0], sizes = [1, 128], strides = [1, 1]} : vector<10x128xf32> to vector<1x128xf32>
    %100 = vector.broadcast %98 : vector<8x1xf32> to vector<8x128xf32>
    %101 = vector.broadcast %99 : vector<1x128xf32> to vector<8x128xf32>
    %102 = arith.mulf %100, %101 : vector<8x128xf32>
    %103 = arith.addf %97, %102 : vector<8x128xf32>
    %104 = vector.extract_strided_slice %50 {offsets = [0, 9], sizes = [8, 1], strides = [1, 1]} : vector<8x10xf32> to vector<8x1xf32>
    %105 = vector.extract_strided_slice %49 {offsets = [9, 0], sizes = [1, 128], strides = [1, 1]} : vector<10x128xf32> to vector<1x128xf32>
    %106 = vector.broadcast %104 : vector<8x1xf32> to vector<8x128xf32>
    %107 = vector.broadcast %105 : vector<1x128xf32> to vector<8x128xf32>
    %108 = arith.mulf %106, %107 : vector<8x128xf32>
    %109 = arith.addf %103, %108 : vector<8x128xf32>
    %c0_11 = arith.constant 0 : index
    %c0_12 = arith.constant 0 : index
    %110 = vector.load %arg6[%c0_11, %c0_12] : memref<8x1xf32, #tpu.memory_space<vmem>>, vector<8x1xf32>
    %111 = vector.broadcast %110 : vector<8x1xf32> to vector<8x128xf32>
    %112 = arith.addf %109, %111 : vector<8x128xf32>
    %cst_13 = arith.constant 0.000000e+00 : f32
    %113 = vector.broadcast %cst_13 : f32 to vector<8x128xf32>
    %114 = arith.maximumf %112, %113 : vector<8x128xf32>
    %c2_i32 = arith.constant 2 : i32
    %c-1028477379_i32_14 = arith.constant -1028477379 : i32
    %115 = arith.muli %c2_i32, %c-1028477379_i32_14 : i32
    %116 = arith.addi %4, %115 : i32
    %117 = tpu.iota {dimensions = array<i32: 0>} : vector<8x128xi32>
    %c128_i32_15 = arith.constant 128 : i32
    %118 = vector.broadcast %c128_i32_15 : i32 to vector<8x128xi32>
    %119 = arith.muli %117, %118 : vector<8x128xi32>
    %120 = tpu.iota {dimensions = array<i32: 1>} : vector<8x128xi32>
    %121 = arith.addi %119, %120 : vector<8x128xi32>
    %122 = vector.broadcast %116 : i32 to vector<8x128xi32>
    %123 = arith.xori %121, %122 : vector<8x128xi32>
    %c16_i32_16 = arith.constant 16 : i32
    %124 = vector.broadcast %c16_i32_16 : i32 to vector<8x128xi32>
    %125 = arith.shrui %123, %124 : vector<8x128xi32>
    %126 = arith.xori %123, %125 : vector<8x128xi32>
    %c2146121005_i32_17 = arith.constant 2146121005 : i32
    %127 = vector.broadcast %c2146121005_i32_17 : i32 to vector<8x128xi32>
    %128 = arith.muli %126, %127 : vector<8x128xi32>
    %c15_i32_18 = arith.constant 15 : i32
    %129 = vector.broadcast %c15_i32_18 : i32 to vector<8x128xi32>
    %130 = arith.shrui %128, %129 : vector<8x128xi32>
    %131 = arith.xori %128, %130 : vector<8x128xi32>
    %c-2073254261_i32_19 = arith.constant -2073254261 : i32
    %132 = vector.broadcast %c-2073254261_i32_19 : i32 to vector<8x128xi32>
    %133 = arith.muli %131, %132 : vector<8x128xi32>
    %c16_i32_20 = arith.constant 16 : i32
    %134 = vector.broadcast %c16_i32_20 : i32 to vector<8x128xi32>
    %135 = arith.shrui %133, %134 : vector<8x128xi32>
    %136 = arith.xori %133, %135 : vector<8x128xi32>
    %c-2147483648_i32_21 = arith.constant -2147483648 : i32
    %137 = vector.broadcast %c-2147483648_i32_21 : i32 to vector<8x128xi32>
    %138 = arith.cmpi ult, %136, %137 : vector<8x128xi32>
    %cst_22 = arith.constant 2.000000e+00 : f32
    %139 = vector.broadcast %cst_22 : f32 to vector<8x128xf32>
    %140 = arith.mulf %114, %139 : vector<8x128xf32>
    %cst_23 = arith.constant 0.000000e+00 : f32
    %141 = vector.broadcast %cst_23 : f32 to vector<8x128xf32>
    %142 = arith.select %138, %140, %141 : vector<8x128xi1>, vector<8x128xf32>
    %c0_24 = arith.constant 0 : index
    %c0_25 = arith.constant 0 : index
    %143 = vector.load %arg7[%c0_24, %c0_25] : memref<5x8xf32, #tpu.memory_space<vmem>>, vector<5x8xf32>
    %144 = vector.extract_strided_slice %143 {offsets = [0, 0], sizes = [5, 1], strides = [1, 1]} : vector<5x8xf32> to vector<5x1xf32>
    %145 = vector.extract_strided_slice %142 {offsets = [0, 0], sizes = [1, 128], strides = [1, 1]} : vector<8x128xf32> to vector<1x128xf32>
    %146 = vector.broadcast %144 : vector<5x1xf32> to vector<5x128xf32>
    %147 = vector.broadcast %145 : vector<1x128xf32> to vector<5x128xf32>
    %148 = arith.mulf %146, %147 : vector<5x128xf32>
    %149 = vector.extract_strided_slice %143 {offsets = [0, 1], sizes = [5, 1], strides = [1, 1]} : vector<5x8xf32> to vector<5x1xf32>
    %150 = vector.extract_strided_slice %142 {offsets = [1, 0], sizes = [1, 128], strides = [1, 1]} : vector<8x128xf32> to vector<1x128xf32>
    %151 = vector.broadcast %149 : vector<5x1xf32> to vector<5x128xf32>
    %152 = vector.broadcast %150 : vector<1x128xf32> to vector<5x128xf32>
    %153 = arith.mulf %151, %152 : vector<5x128xf32>
    %154 = arith.addf %148, %153 : vector<5x128xf32>
    %155 = vector.extract_strided_slice %143 {offsets = [0, 2], sizes = [5, 1], strides = [1, 1]} : vector<5x8xf32> to vector<5x1xf32>
    %156 = vector.extract_strided_slice %142 {offsets = [2, 0], sizes = [1, 128], strides = [1, 1]} : vector<8x128xf32> to vector<1x128xf32>
    %157 = vector.broadcast %155 : vector<5x1xf32> to vector<5x128xf32>
    %158 = vector.broadcast %156 : vector<1x128xf32> to vector<5x128xf32>
    %159 = arith.mulf %157, %158 : vector<5x128xf32>
    %160 = arith.addf %154, %159 : vector<5x128xf32>
    %161 = vector.extract_strided_slice %143 {offsets = [0, 3], sizes = [5, 1], strides = [1, 1]} : vector<5x8xf32> to vector<5x1xf32>
    %162 = vector.extract_strided_slice %142 {offsets = [3, 0], sizes = [1, 128], strides = [1, 1]} : vector<8x128xf32> to vector<1x128xf32>
    %163 = vector.broadcast %161 : vector<5x1xf32> to vector<5x128xf32>
    %164 = vector.broadcast %162 : vector<1x128xf32> to vector<5x128xf32>
    %165 = arith.mulf %163, %164 : vector<5x128xf32>
    %166 = arith.addf %160, %165 : vector<5x128xf32>
    %167 = vector.extract_strided_slice %143 {offsets = [0, 4], sizes = [5, 1], strides = [1, 1]} : vector<5x8xf32> to vector<5x1xf32>
    %168 = vector.extract_strided_slice %142 {offsets = [4, 0], sizes = [1, 128], strides = [1, 1]} : vector<8x128xf32> to vector<1x128xf32>
    %169 = vector.broadcast %167 : vector<5x1xf32> to vector<5x128xf32>
    %170 = vector.broadcast %168 : vector<1x128xf32> to vector<5x128xf32>
    %171 = arith.mulf %169, %170 : vector<5x128xf32>
    %172 = arith.addf %166, %171 : vector<5x128xf32>
    %173 = vector.extract_strided_slice %143 {offsets = [0, 5], sizes = [5, 1], strides = [1, 1]} : vector<5x8xf32> to vector<5x1xf32>
    %174 = vector.extract_strided_slice %142 {offsets = [5, 0], sizes = [1, 128], strides = [1, 1]} : vector<8x128xf32> to vector<1x128xf32>
    %175 = vector.broadcast %173 : vector<5x1xf32> to vector<5x128xf32>
    %176 = vector.broadcast %174 : vector<1x128xf32> to vector<5x128xf32>
    %177 = arith.mulf %175, %176 : vector<5x128xf32>
    %178 = arith.addf %172, %177 : vector<5x128xf32>
    %179 = vector.extract_strided_slice %143 {offsets = [0, 6], sizes = [5, 1], strides = [1, 1]} : vector<5x8xf32> to vector<5x1xf32>
    %180 = vector.extract_strided_slice %142 {offsets = [6, 0], sizes = [1, 128], strides = [1, 1]} : vector<8x128xf32> to vector<1x128xf32>
    %181 = vector.broadcast %179 : vector<5x1xf32> to vector<5x128xf32>
    %182 = vector.broadcast %180 : vector<1x128xf32> to vector<5x128xf32>
    %183 = arith.mulf %181, %182 : vector<5x128xf32>
    %184 = arith.addf %178, %183 : vector<5x128xf32>
    %185 = vector.extract_strided_slice %143 {offsets = [0, 7], sizes = [5, 1], strides = [1, 1]} : vector<5x8xf32> to vector<5x1xf32>
    %186 = vector.extract_strided_slice %142 {offsets = [7, 0], sizes = [1, 128], strides = [1, 1]} : vector<8x128xf32> to vector<1x128xf32>
    %187 = vector.broadcast %185 : vector<5x1xf32> to vector<5x128xf32>
    %188 = vector.broadcast %186 : vector<1x128xf32> to vector<5x128xf32>
    %189 = arith.mulf %187, %188 : vector<5x128xf32>
    %190 = arith.addf %184, %189 : vector<5x128xf32>
    %c0_26 = arith.constant 0 : index
    %c0_27 = arith.constant 0 : index
    %191 = vector.load %arg8[%c0_26, %c0_27] : memref<5x1xf32, #tpu.memory_space<vmem>>, vector<5x1xf32>
    %192 = vector.broadcast %191 : vector<5x1xf32> to vector<5x128xf32>
    %193 = arith.addf %190, %192 : vector<5x128xf32>
    %cst_28 = arith.constant 0.000000e+00 : f32
    %194 = vector.broadcast %cst_28 : f32 to vector<5x128xf32>
    %195 = arith.maximumf %193, %194 : vector<5x128xf32>
    %c3_i32 = arith.constant 3 : i32
    %c-1028477379_i32_29 = arith.constant -1028477379 : i32
    %196 = arith.muli %c3_i32, %c-1028477379_i32_29 : i32
    %197 = arith.addi %4, %196 : i32
    %198 = tpu.iota {dimensions = array<i32: 0>} : vector<5x128xi32>
    %c128_i32_30 = arith.constant 128 : i32
    %199 = vector.broadcast %c128_i32_30 : i32 to vector<5x128xi32>
    %200 = arith.muli %198, %199 : vector<5x128xi32>
    %201 = tpu.iota {dimensions = array<i32: 1>} : vector<5x128xi32>
    %202 = arith.addi %200, %201 : vector<5x128xi32>
    %203 = vector.broadcast %197 : i32 to vector<5x128xi32>
    %204 = arith.xori %202, %203 : vector<5x128xi32>
    %c16_i32_31 = arith.constant 16 : i32
    %205 = vector.broadcast %c16_i32_31 : i32 to vector<5x128xi32>
    %206 = arith.shrui %204, %205 : vector<5x128xi32>
    %207 = arith.xori %204, %206 : vector<5x128xi32>
    %c2146121005_i32_32 = arith.constant 2146121005 : i32
    %208 = vector.broadcast %c2146121005_i32_32 : i32 to vector<5x128xi32>
    %209 = arith.muli %207, %208 : vector<5x128xi32>
    %c15_i32_33 = arith.constant 15 : i32
    %210 = vector.broadcast %c15_i32_33 : i32 to vector<5x128xi32>
    %211 = arith.shrui %209, %210 : vector<5x128xi32>
    %212 = arith.xori %209, %211 : vector<5x128xi32>
    %c-2073254261_i32_34 = arith.constant -2073254261 : i32
    %213 = vector.broadcast %c-2073254261_i32_34 : i32 to vector<5x128xi32>
    %214 = arith.muli %212, %213 : vector<5x128xi32>
    %c16_i32_35 = arith.constant 16 : i32
    %215 = vector.broadcast %c16_i32_35 : i32 to vector<5x128xi32>
    %216 = arith.shrui %214, %215 : vector<5x128xi32>
    %217 = arith.xori %214, %216 : vector<5x128xi32>
    %c-2147483648_i32_36 = arith.constant -2147483648 : i32
    %218 = vector.broadcast %c-2147483648_i32_36 : i32 to vector<5x128xi32>
    %219 = arith.cmpi ult, %217, %218 : vector<5x128xi32>
    %cst_37 = arith.constant 2.000000e+00 : f32
    %220 = vector.broadcast %cst_37 : f32 to vector<5x128xf32>
    %221 = arith.mulf %195, %220 : vector<5x128xf32>
    %cst_38 = arith.constant 0.000000e+00 : f32
    %222 = vector.broadcast %cst_38 : f32 to vector<5x128xf32>
    %223 = arith.select %219, %221, %222 : vector<5x128xi1>, vector<5x128xf32>
    %c0_39 = arith.constant 0 : index
    %c0_40 = arith.constant 0 : index
    %224 = vector.load %arg9[%c0_39, %c0_40] : memref<2x5xf32, #tpu.memory_space<vmem>>, vector<2x5xf32>
    %225 = vector.extract_strided_slice %224 {offsets = [0, 0], sizes = [2, 1], strides = [1, 1]} : vector<2x5xf32> to vector<2x1xf32>
    %226 = vector.extract_strided_slice %223 {offsets = [0, 0], sizes = [1, 128], strides = [1, 1]} : vector<5x128xf32> to vector<1x128xf32>
    %227 = vector.broadcast %225 : vector<2x1xf32> to vector<2x128xf32>
    %228 = vector.broadcast %226 : vector<1x128xf32> to vector<2x128xf32>
    %229 = arith.mulf %227, %228 : vector<2x128xf32>
    %230 = vector.extract_strided_slice %224 {offsets = [0, 1], sizes = [2, 1], strides = [1, 1]} : vector<2x5xf32> to vector<2x1xf32>
    %231 = vector.extract_strided_slice %223 {offsets = [1, 0], sizes = [1, 128], strides = [1, 1]} : vector<5x128xf32> to vector<1x128xf32>
    %232 = vector.broadcast %230 : vector<2x1xf32> to vector<2x128xf32>
    %233 = vector.broadcast %231 : vector<1x128xf32> to vector<2x128xf32>
    %234 = arith.mulf %232, %233 : vector<2x128xf32>
    %235 = arith.addf %229, %234 : vector<2x128xf32>
    %236 = vector.extract_strided_slice %224 {offsets = [0, 2], sizes = [2, 1], strides = [1, 1]} : vector<2x5xf32> to vector<2x1xf32>
    %237 = vector.extract_strided_slice %223 {offsets = [2, 0], sizes = [1, 128], strides = [1, 1]} : vector<5x128xf32> to vector<1x128xf32>
    %238 = vector.broadcast %236 : vector<2x1xf32> to vector<2x128xf32>
    %239 = vector.broadcast %237 : vector<1x128xf32> to vector<2x128xf32>
    %240 = arith.mulf %238, %239 : vector<2x128xf32>
    %241 = arith.addf %235, %240 : vector<2x128xf32>
    %242 = vector.extract_strided_slice %224 {offsets = [0, 3], sizes = [2, 1], strides = [1, 1]} : vector<2x5xf32> to vector<2x1xf32>
    %243 = vector.extract_strided_slice %223 {offsets = [3, 0], sizes = [1, 128], strides = [1, 1]} : vector<5x128xf32> to vector<1x128xf32>
    %244 = vector.broadcast %242 : vector<2x1xf32> to vector<2x128xf32>
    %245 = vector.broadcast %243 : vector<1x128xf32> to vector<2x128xf32>
    %246 = arith.mulf %244, %245 : vector<2x128xf32>
    %247 = arith.addf %241, %246 : vector<2x128xf32>
    %248 = vector.extract_strided_slice %224 {offsets = [0, 4], sizes = [2, 1], strides = [1, 1]} : vector<2x5xf32> to vector<2x1xf32>
    %249 = vector.extract_strided_slice %223 {offsets = [4, 0], sizes = [1, 128], strides = [1, 1]} : vector<5x128xf32> to vector<1x128xf32>
    %250 = vector.broadcast %248 : vector<2x1xf32> to vector<2x128xf32>
    %251 = vector.broadcast %249 : vector<1x128xf32> to vector<2x128xf32>
    %252 = arith.mulf %250, %251 : vector<2x128xf32>
    %253 = arith.addf %247, %252 : vector<2x128xf32>
    %c0_41 = arith.constant 0 : index
    %c0_42 = arith.constant 0 : index
    %254 = vector.load %arg10[%c0_41, %c0_42] : memref<2x1xf32, #tpu.memory_space<vmem>>, vector<2x1xf32>
    %255 = vector.broadcast %254 : vector<2x1xf32> to vector<2x128xf32>
    %256 = arith.addf %253, %255 : vector<2x128xf32>
    %c0_43 = arith.constant 0 : index
    %c0_44 = arith.constant 0 : index
    %257 = vector.load %arg11[%c0_43, %c0_44] : memref<2x128xf32, #tpu.memory_space<vmem>>, vector<2x128xf32>
    tpu.vector_store %arg11[%c0_43, %c0_44], %256 {strides = array<i32>} : memref<2x128xf32, #tpu.memory_space<vmem>>, vector<2x128xf32>,
    return
  }
  func.func @transform_0(%arg0: i32, %arg1: memref<1xi32, #tpu.memory_space<smem>>) -> (i32, i32) {
    %c0_i32 = arith.constant 0 : i32
    %c0_i32_0 = arith.constant 0 : i32
    return %c0_i32, %arg0 : i32, i32
  }
  func.func @transform_1(%arg0: i32, %arg1: memref<1xi32, #tpu.memory_space<smem>>) -> (i32, i32) {
    %c0_i32 = arith.constant 0 : i32
    %c0_i32_0 = arith.constant 0 : i32
    %c0_i32_1 = arith.constant 0 : i32
    return %c0_i32, %c0_i32_0 : i32, i32
  }
  func.func @transform_2(%arg0: i32, %arg1: memref<1xi32, #tpu.memory_space<smem>>) -> (i32, i32) {
    %c0_i32 = arith.constant 0 : i32
    %c0_i32_0 = arith.constant 0 : i32
    %c0_i32_1 = arith.constant 0 : i32
    return %c0_i32, %c0_i32_0 : i32, i32
  }
  func.func @transform_3(%arg0: i32, %arg1: memref<1xi32, #tpu.memory_space<smem>>) -> (i32, i32) {
    %c0_i32 = arith.constant 0 : i32
    %c0_i32_0 = arith.constant 0 : i32
    %c0_i32_1 = arith.constant 0 : i32
    return %c0_i32, %c0_i32_0 : i32, i32
  }
  func.func @transform_4(%arg0: i32, %arg1: memref<1xi32, #tpu.memory_space<smem>>) -> (i32, i32) {
    %c0_i32 = arith.constant 0 : i32
    %c0_i32_0 = arith.constant 0 : i32
    %c0_i32_1 = arith.constant 0 : i32
    return %c0_i32, %c0_i32_0 : i32, i32
  }
  func.func @transform_5(%arg0: i32, %arg1: memref<1xi32, #tpu.memory_space<smem>>) -> (i32, i32) {
    %c0_i32 = arith.constant 0 : i32
    %c0_i32_0 = arith.constant 0 : i32
    %c0_i32_1 = arith.constant 0 : i32
    return %c0_i32, %c0_i32_0 : i32, i32
  }
  func.func @transform_6(%arg0: i32, %arg1: memref<1xi32, #tpu.memory_space<smem>>) -> (i32, i32) {
    %c0_i32 = arith.constant 0 : i32
    %c0_i32_0 = arith.constant 0 : i32
    %c0_i32_1 = arith.constant 0 : i32
    return %c0_i32, %c0_i32_0 : i32, i32
  }
  func.func @transform_7(%arg0: i32, %arg1: memref<1xi32, #tpu.memory_space<smem>>) -> (i32, i32) {
    %c0_i32 = arith.constant 0 : i32
    %c0_i32_0 = arith.constant 0 : i32
    %c0_i32_1 = arith.constant 0 : i32
    return %c0_i32, %c0_i32_0 : i32, i32
  }
  func.func @transform_8(%arg0: i32, %arg1: memref<1xi32, #tpu.memory_space<smem>>) -> (i32, i32) {
    %c0_i32 = arith.constant 0 : i32
    %c0_i32_0 = arith.constant 0 : i32
    %c0_i32_1 = arith.constant 0 : i32
    return %c0_i32, %c0_i32_0 : i32, i32
  }
  func.func @transform_9(%arg0: i32, %arg1: memref<1xi32, #tpu.memory_space<smem>>) -> (i32, i32) {
    %c0_i32 = arith.constant 0 : i32
    %c0_i32_0 = arith.constant 0 : i32
    return %c0_i32, %arg0 : i32, i32
  }
}

</mosaic_0001>

<llo_original>
// kernel: tpu_custom_call.1
$region0: #{tpu_custom_call.1}
  #allocation0 [shape = 'u32[]', space=smem, size = 0x4, offset = 0x4, fixed_abs, tag = 'smem constant byte address 0x4 - core index']
  #allocation1 [shape = 'u32[144,128]{1,0:T(1,128)}', space=vmem, size = 0x12000, scoped, tag = 'internal scratch']
  #allocation2 [shape = 's32[1]{0}', space=sflag, size = 0x4, scoped, tag = 'scoped memory for tpu_custom_call.1']
  #allocation3 [shape = 's32[1]{0:T(128)S(6)}', space=smem, size = 0x200, scoped, tag = 'prefetched SMEM operand 0']
  %s0 = inlined_call_operand.<no memory space> [shape: s32[1], index: 0, kind: input, shape index: {}]
  %s1 = inlined_call_operand.vmem [shape: f32[2,128], index: 1, kind: input, shape index: {}]
  %s2 = inlined_call_operand.vmem [shape: f32[10,2], index: 2, kind: input, shape index: {}]
  %s3 = inlined_call_operand.vmem [shape: f32[10,1], index: 3, kind: input, shape index: {}]
  %s4 = inlined_call_operand.vmem [shape: f32[8,10], index: 4, kind: input, shape index: {}]
  %s5 = inlined_call_operand.vmem [shape: f32[8,1], index: 5, kind: input, shape index: {}]
  %s6 = inlined_call_operand.vmem [shape: f32[5,8], index: 6, kind: input, shape index: {}]
  %s7 = inlined_call_operand.vmem [shape: f32[5,1], index: 7, kind: input, shape index: {}]
  %s8 = inlined_call_operand.vmem [shape: f32[2,5], index: 8, kind: input, shape index: {}]
  %s9 = inlined_call_operand.vmem [shape: f32[2,1], index: 9, kind: input, shape index: {}]
  %s10 = inlined_call_operand.hbm [shape: f32[2,128], index: 10, kind: output, shape index: {}]
  %s11 = sld [smem:[#allocation0]]
  $region46: #{tpu_custom_call.1} parent=0
    _
  %s13 = ssub.s32 1, %s11
  %s14 = scalar_select 0, %s13, %s11
  %15 = sst [smem:[#allocation3]] %s0
  $region1: #{tpu_custom_call.1} parent=0
    #allocation4 [shape = 'u8[1024]{0}', space=vmem, size = 0x400, scoped, tag = 'output window, operand 0, single buffered']
    #allocation5 [shape = 's32[1]{0}', space=sflag, size = 0x4, scoped, tag = 'scoped memory for tpu_custom_call.1']
    %16 = vsyncpa [#allocation5], 0
    // Predicated region
    $region2: #{tpu_custom_call.1} parent=1 // pred_check
      _
    $region3: #{tpu_custom_call.1} parent=1 // pred_check_branch
      %18 = sbr.rel (0) target = $region5
    $region4: #{tpu_custom_call.1} parent=1 // pred_region
      _
    $region5: #{tpu_custom_call.1} parent=1 // pred_fallthru
      _
    // Predicated region
    $region6: #{tpu_custom_call.1} parent=1 // pred_check
      _
    $region7: #{tpu_custom_call.1} parent=1 // pred_check_branch
      %20 = sbr.rel (0) target = $region9
    $region8: #{tpu_custom_call.1} parent=1 // pred_region
      _
    $region9: #{tpu_custom_call.1} parent=1 // pred_fallthru
      _
    // Predicated region
    $region10: #{tpu_custom_call.1} parent=1 // pred_check
      _
    $region11: #{tpu_custom_call.1} parent=1 // pred_check_branch
      %22 = sbr.rel (0) target = $region13
    $region12: #{tpu_custom_call.1} parent=1 // pred_region
      _
    $region13: #{tpu_custom_call.1} parent=1 // pred_fallthru
      _
    // Predicated region
    $region14: #{tpu_custom_call.1} parent=1 // pred_check
      _
    $region15: #{tpu_custom_call.1} parent=1 // pred_check_branch
      %24 = sbr.rel (0) target = $region17
    $region16: #{tpu_custom_call.1} parent=1 // pred_region
      _
    $region17: #{tpu_custom_call.1} parent=1 // pred_fallthru
      _
    // Predicated region
    $region18: #{tpu_custom_call.1} parent=1 // pred_check
      _
    $region19: #{tpu_custom_call.1} parent=1 // pred_check_branch
      %26 = sbr.rel (0) target = $region21
    $region20: #{tpu_custom_call.1} parent=1 // pred_region
      _
    $region21: #{tpu_custom_call.1} parent=1 // pred_fallthru
      _
    // Predicated region
    $region22: #{tpu_custom_call.1} parent=1 // pred_check
      _
    $region23: #{tpu_custom_call.1} parent=1 // pred_check_branch
      %28 = sbr.rel (0) target = $region25
    $region24: #{tpu_custom_call.1} parent=1 // pred_region
      _
    $region25: #{tpu_custom_call.1} parent=1 // pred_fallthru
      _
    // Predicated region
    $region26: #{tpu_custom_call.1} parent=1 // pred_check
      _
    $region27: #{tpu_custom_call.1} parent=1 // pred_check_branch
      %30 = sbr.rel (0) target = $region29
    $region28: #{tpu_custom_call.1} parent=1 // pred_region
      _
    $region29: #{tpu_custom_call.1} parent=1 // pred_fallthru
      _
    // Predicated region
    $region30: #{tpu_custom_call.1} parent=1 // pred_check
      _
    $region31: #{tpu_custom_call.1} parent=1 // pred_check_branch
      %32 = sbr.rel (0) target = $region33
    $region32: #{tpu_custom_call.1} parent=1 // pred_region
      _
    $region33: #{tpu_custom_call.1} parent=1 // pred_fallthru
      _
    // Predicated region
    $region34: #{tpu_custom_call.1} parent=1 // pred_check
      _
    $region35: #{tpu_custom_call.1} parent=1 // pred_check_branch
      %34 = sbr.rel (0) target = $region37
    $region36: #{tpu_custom_call.1} parent=1 // pred_region
      _
    $region37: #{tpu_custom_call.1} parent=1 // pred_fallthru
      _
    %v35 = vld [vmem:[%s1] sm:$0x3]
    %s36 = sld [smem:[#allocation3]]
    %s37 = smul.u32 %s36, 2654435769
    %s38 = smul.u32 0, 2246822519
    %s39 = sadd.s32 %s37, %s38
    %v40 = vld [vmem:[%s2] sm:$0xff]
    %v41 = vld [vmem:[%s2 + $0x8] sm:$0x3]
    %43 = vset.pattern.permute.xlu0 0
    %44 = vperm.xlu0 %43, %v40
    %v45 = vpop.permute.xlu0 %44
    %48 = vset.pattern.permute.xlu0 0
    %49 = vperm.xlu0 %48, %v41
    %v50 = vpop.permute.xlu0 %49
    %v52 = vlaneseq
    %v53 = vshrl.u32 %v52, 7
    %v54 = vsub.s32 0, %v53
    %v55 = vrot.slane %v35, %v54
    %v56 = vmul.f32 %v45, %v55
    %v57 = vmul.f32 %v50, %v55
    %58 = vset.pattern.permute.xlu0 1
    %59 = vperm.xlu0 %58, %v40
    %v60 = vpop.permute.xlu0 %59
    %62 = vset.pattern.permute.xlu0 1
    %63 = vperm.xlu0 %62, %v41
    %v64 = vpop.permute.xlu0 %63
    %v66 = vlaneseq
    %v67 = vshrl.u32 %v66, 7
    %v68 = vsub.s32 1, %v67
    %v69 = vrot.slane %v35, %v68
    %v70 = vmul.f32 %v60, %v69
    %v71 = vmul.f32 %v64, %v69
    %v72 = vadd.f32 %v56, %v70
    %v73 = vadd.f32 %v57, %v71
    %v74 = vld [vmem:[%s3] sm:$0xff]
    %v75 = vld [vmem:[%s3 + $0x8] sm:$0x3]
    %77 = vset.pattern.permute.xlu0 0
    %78 = vperm.xlu0 %77, %v74
    %v79 = vpop.permute.xlu0 %78
    %82 = vset.pattern.permute.xlu0 0
    %83 = vperm.xlu0 %82, %v75
    %v84 = vpop.permute.xlu0 %83
    %v86 = vadd.f32 %v72, %v79
    %v87 = vadd.f32 %v73, %v84
    %v88 = vmax.f32 %v86, 0.0
    %v89 = vmax.f32 %v87, 0.0
    %s90 = sadd.s32 %s39, 3266489917
    %v91 = vlaneseq
    %v92 = vshrl.u32 %v91, 7
    %v93 = vadd.s32 %v92, 8
    %v94 = vmul.u32 %v92, 128
    %v95 = vmul.u32 %v93, 128
    %v96 = vlaneseq
    %v97 = vand.u32 %v96, 127
    %v98 = vadd.s32 %v94, %v97
    %v99 = vadd.s32 %v95, %v97
    %v100 = vstv %s90
    %v101 = vxor.u32 %v98, %v100
    %v102 = vxor.u32 %v99, %v100
    %v103 = vshrl.u32 %v101, 16
    %v104 = vshrl.u32 %v102, 16
    %v105 = vxor.u32 %v101, %v103
    %v106 = vxor.u32 %v102, %v104
    %v107 = vmul.u32 %v105, 2146121005
    %v108 = vmul.u32 %v106, 2146121005
    %v109 = vshrl.u32 %v107, 15
    %v110 = vshrl.u32 %v108, 15
    %v111 = vxor.u32 %v107, %v109
    %v112 = vxor.u32 %v108, %v110
    %v113 = vmul.u32 %v111, 2221713035
    %v114 = vmul.u32 %v112, 2221713035
    %v115 = vshrl.u32 %v113, 16
    %v116 = vshrl.u32 %v114, 16
    %v117 = vxor.u32 %v113, %v115
    %v118 = vxor.u32 %v114, %v116
    %vm119 = vcmp.lt.u32.totalorder %v117, 2147483648
    %vm120 = vcmp.lt.u32.totalorder %v118, 2147483648
    %v121 = vmul.f32 %v88, 2.0
    %v122 = vmul.f32 %v89, 2.0
    %v123 = vsel %vm119, %v121, 0.0
    %v124 = vsel %vm120, %v122, 0.0
    %v125 = vld [vmem:[%s4] sm:$0xff]
    %127 = vset.pattern.permute.xlu0 0
    %128 = vperm.xlu0 %127, %v125
    %v129 = vpop.permute.xlu0 %128
    %v131 = vlaneseq
    %v132 = vshrl.u32 %v131, 7
    %v133 = vsub.s32 0, %v132
    %v134 = vrot.slane %v123, %v133
    %v135 = vmul.f32 %v129, %v134
    %136 = vset.pattern.permute.xlu0 1
    %137 = vperm.xlu0 %136, %v125
    %v138 = vpop.permute.xlu0 %137
    %v140 = vlaneseq
    %v141 = vshrl.u32 %v140, 7
    %v142 = vsub.s32 1, %v141
    %v143 = vrot.slane %v123, %v142
    %v144 = vmul.f32 %v138, %v143
    %v145 = vadd.f32 %v135, %v144
    %146 = vset.pattern.permute.xlu0 2
    %147 = vperm.xlu0 %146, %v125
    %v148 = vpop.permute.xlu0 %147
    %v150 = vlaneseq
    %v151 = vshrl.u32 %v150, 7
    %v152 = vsub.s32 2, %v151
    %v153 = vrot.slane %v123, %v152
    %v154 = vmul.f32 %v148, %v153
    %v155 = vadd.f32 %v145, %v154
    %156 = vset.pattern.permute.xlu0 3
    %157 = vperm.xlu0 %156, %v125
    %v158 = vpop.permute.xlu0 %157
    %v160 = vlaneseq
    %v161 = vshrl.u32 %v160, 7
    %v162 = vsub.s32 3, %v161
    %v163 = vrot.slane %v123, %v162
    %v164 = vmul.f32 %v158, %v163
    %v165 = vadd.f32 %v155, %v164
    %166 = vset.pattern.permute.xlu0 4
    %167 = vperm.xlu0 %166, %v125
    %v168 = vpop.permute.xlu0 %167
    %v170 = vlaneseq
    %v171 = vshrl.u32 %v170, 7
    %v172 = vsub.s32 4, %v171
    %v173 = vrot.slane %v123, %v172
    %v174 = vmul.f32 %v168, %v173
    %v175 = vadd.f32 %v165, %v174
    %176 = vset.pattern.permute.xlu0 5
    %177 = vperm.xlu0 %176, %v125
    %v178 = vpop.permute.xlu0 %177
    %v180 = vlaneseq
    %v181 = vshrl.u32 %v180, 7
    %v182 = vsub.s32 5, %v181
    %v183 = vrot.slane %v123, %v182
    %v184 = vmul.f32 %v178, %v183
    %v185 = vadd.f32 %v175, %v184
    %186 = vset.pattern.permute.xlu0 6
    %187 = vperm.xlu0 %186, %v125
    %v188 = vpop.permute.xlu0 %187
    %v190 = vlaneseq
    %v191 = vshrl.u32 %v190, 7
    %v192 = vsub.s32 6, %v191
    %v193 = vrot.slane %v123, %v192
    %v194 = vmul.f32 %v188, %v193
    %v195 = vadd.f32 %v185, %v194
    %196 = vset.pattern.permute.xlu0 7
    %197 = vperm.xlu0 %196, %v125
    %v198 = vpop.permute.xlu0 %197
    %v200 = vlaneseq
    %v201 = vshrl.u32 %v200, 7
    %v202 = vsub.s32 7, %v201
    %v203 = vrot.slane %v123, %v202
    %v204 = vmul.f32 %v198, %v203
    %v205 = vadd.f32 %v195, %v204
    %206 = vset.pattern.permute.xlu0 8
    %207 = vperm.xlu0 %206, %v125
    %v208 = vpop.permute.xlu0 %207
    %v210 = vlaneseq
    %v211 = vshrl.u32 %v210, 7
    %v212 = vsub.s32 0, %v211
    %v213 = vrot.slane %v124, %v212
    %v214 = vmul.f32 %v208, %v213
    %v215 = vadd.f32 %v205, %v214
    %216 = vset.pattern.permute.xlu0 9
    %217 = vperm.xlu0 %216, %v125
    %v218 = vpop.permute.xlu0 %217
    %v220 = vlaneseq
    %v221 = vshrl.u32 %v220, 7
    %v222 = vsub.s32 1, %v221
    %v223 = vrot.slane %v124, %v222
    %v224 = vmul.f32 %v218, %v223
    %v225 = vadd.f32 %v215, %v224
    %v226 = vld [vmem:[%s5] sm:$0xff]
    %228 = vset.pattern.permute.xlu0 0
    %229 = vperm.xlu0 %228, %v226
    %v230 = vpop.permute.xlu0 %229
    %v232 = vadd.f32 %v225, %v230
    %v233 = vmax.f32 %v232, 0.0
    %s234 = sadd.s32 %s39, 2238012538
    %v235 = vstv %s234
    %v236 = vxor.u32 %v98, %v235
    %v237 = vshrl.u32 %v236, 16
    %v238 = vxor.u32 %v236, %v237
    %v239 = vmul.u32 %v238, 2146121005
    %v240 = vshrl.u32 %v239, 15
    %v241 = vxor.u32 %v239, %v240
    %v242 = vmul.u32 %v241, 2221713035
    %v243 = vshrl.u32 %v242, 16
    %v244 = vxor.u32 %v242, %v243
    %vm245 = vcmp.lt.u32.totalorder %v244, 2147483648
    %v246 = vmul.f32 %v233, 2.0
    %v247 = vsel %vm245, %v246, 0.0
    %v248 = vld [vmem:[%s6] sm:$0x1f]
    %250 = vset.pattern.permute.xlu0 0
    %251 = vperm.xlu0 %250, %v248
    %v252 = vpop.permute.xlu0 %251
    %v254 = vlaneseq
    %v255 = vshrl.u32 %v254, 7
    %v256 = vsub.s32 0, %v255
    %v257 = vrot.slane %v247, %v256
    %v258 = vmul.f32 %v252, %v257
    %259 = vset.pattern.permute.xlu0 1
    %260 = vperm.xlu0 %259, %v248
    %v261 = vpop.permute.xlu0 %260
    %v263 = vlaneseq
    %v264 = vshrl.u32 %v263, 7
    %v265 = vsub.s32 1, %v264
    %v266 = vrot.slane %v247, %v265
    %v267 = vmul.f32 %v261, %v266
    %v268 = vadd.f32 %v258, %v267
    %269 = vset.pattern.permute.xlu0 2
    %270 = vperm.xlu0 %269, %v248
    %v271 = vpop.permute.xlu0 %270
    %v273 = vlaneseq
    %v274 = vshrl.u32 %v273, 7
    %v275 = vsub.s32 2, %v274
    %v276 = vrot.slane %v247, %v275
    %v277 = vmul.f32 %v271, %v276
    %v278 = vadd.f32 %v268, %v277
    %279 = vset.pattern.permute.xlu0 3
    %280 = vperm.xlu0 %279, %v248
    %v281 = vpop.permute.xlu0 %280
    %v283 = vlaneseq
    %v284 = vshrl.u32 %v283, 7
    %v285 = vsub.s32 3, %v284
    %v286 = vrot.slane %v247, %v285
    %v287 = vmul.f32 %v281, %v286
    %v288 = vadd.f32 %v278, %v287
    %289 = vset.pattern.permute.xlu0 4
    %290 = vperm.xlu0 %289, %v248
    %v291 = vpop.permute.xlu0 %290
    %v293 = vlaneseq
    %v294 = vshrl.u32 %v293, 7
    %v295 = vsub.s32 4, %v294
    %v296 = vrot.slane %v247, %v295
    %v297 = vmul.f32 %v291, %v296
    %v298 = vadd.f32 %v288, %v297
    %299 = vset.pattern.permute.xlu0 5
    %300 = vperm.xlu0 %299, %v248
    %v301 = vpop.permute.xlu0 %300
    %v303 = vlaneseq
    %v304 = vshrl.u32 %v303, 7
    %v305 = vsub.s32 5, %v304
    %v306 = vrot.slane %v247, %v305
    %v307 = vmul.f32 %v301, %v306
    %v308 = vadd.f32 %v298, %v307
    %309 = vset.pattern.permute.xlu0 6
    %310 = vperm.xlu0 %309, %v248
    %v311 = vpop.permute.xlu0 %310
    %v313 = vlaneseq
    %v314 = vshrl.u32 %v313, 7
    %v315 = vsub.s32 6, %v314
    %v316 = vrot.slane %v247, %v315
    %v317 = vmul.f32 %v311, %v316
    %v318 = vadd.f32 %v308, %v317
    %319 = vset.pattern.permute.xlu0 7
    %320 = vperm.xlu0 %319, %v248
    %v321 = vpop.permute.xlu0 %320
    %v323 = vlaneseq
    %v324 = vshrl.u32 %v323, 7
    %v325 = vsub.s32 7, %v324
    %v326 = vrot.slane %v247, %v325
    %v327 = vmul.f32 %v321, %v326
    %v328 = vadd.f32 %v318, %v327
    %v329 = vld [vmem:[%s7] sm:$0x1f]
    %331 = vset.pattern.permute.xlu0 0
    %332 = vperm.xlu0 %331, %v329
    %v333 = vpop.permute.xlu0 %332
    %v335 = vadd.f32 %v328, %v333
    %v336 = vmax.f32 %v335, 0.0
    %s337 = sadd.s32 %s39, 1209535159
    %v338 = vstv %s337
    %v339 = vxor.u32 %v98, %v338
    %v340 = vshrl.u32 %v339, 16
    %v341 = vxor.u32 %v339, %v340
    %v342 = vmul.u32 %v341, 2146121005
    %v343 = vshrl.u32 %v342, 15
    %v344 = vxor.u32 %v342, %v343
    %v345 = vmul.u32 %v344, 2221713035
    %v346 = vshrl.u32 %v345, 16
    %v347 = vxor.u32 %v345, %v346
    %vm348 = vcmp.lt.u32.totalorder %v347, 2147483648
    %v349 = vmul.f32 %v336, 2.0
    %v350 = vsel %vm348, %v349, 0.0
    %v351 = vld [vmem:[%s8] sm:$0x3]
    %353 = vset.pattern.permute.xlu0 0
    %354 = vperm.xlu0 %353, %v351
    %v355 = vpop.permute.xlu0 %354
    %v357 = vlaneseq
    %v358 = vshrl.u32 %v357, 7
    %v359 = vsub.s32 0, %v358
    %v360 = vrot.slane %v350, %v359
    %v361 = vmul.f32 %v355, %v360
    %362 = vset.pattern.permute.xlu0 1
    %363 = vperm.xlu0 %362, %v351
    %v364 = vpop.permute.xlu0 %363
    %v366 = vlaneseq
    %v367 = vshrl.u32 %v366, 7
    %v368 = vsub.s32 1, %v367
    %v369 = vrot.slane %v350, %v368
    %v370 = vmul.f32 %v364, %v369
    %v371 = vadd.f32 %v361, %v370
    %372 = vset.pattern.permute.xlu0 2
    %373 = vperm.xlu0 %372, %v351
    %v374 = vpop.permute.xlu0 %373
    %v376 = vlaneseq
    %v377 = vshrl.u32 %v376, 7
    %v378 = vsub.s32 2, %v377
    %v379 = vrot.slane %v350, %v378
    %v380 = vmul.f32 %v374, %v379
    %v381 = vadd.f32 %v371, %v380
    %382 = vset.pattern.permute.xlu0 3
    %383 = vperm.xlu0 %382, %v351
    %v384 = vpop.permute.xlu0 %383
    %v386 = vlaneseq
    %v387 = vshrl.u32 %v386, 7
    %v388 = vsub.s32 3, %v387
    %v389 = vrot.slane %v350, %v388
    %v390 = vmul.f32 %v384, %v389
    %v391 = vadd.f32 %v381, %v390
    %392 = vset.pattern.permute.xlu0 4
    %393 = vperm.xlu0 %392, %v351
    %v394 = vpop.permute.xlu0 %393
    %v396 = vlaneseq
    %v397 = vshrl.u32 %v396, 7
    %v398 = vsub.s32 4, %v397
    %v399 = vrot.slane %v350, %v398
    %v400 = vmul.f32 %v394, %v399
    %v401 = vadd.f32 %v391, %v400
    %v402 = vld [vmem:[%s9] sm:$0x3]
    %404 = vset.pattern.permute.xlu0 0
    %405 = vperm.xlu0 %404, %v402
    %v406 = vpop.permute.xlu0 %405
    %v408 = vadd.f32 %v401, %v406
    %409 = vst [vmem:[#allocation4] sm:$0x3] %v408
    // Predicated region
    $region38: #{tpu_custom_call.1} parent=1 // pred_check
      _
    $region39: #{tpu_custom_call.1} parent=1 // pred_check_branch
      %411 = sbr.rel (0) target = $region41
    $region40: #{tpu_custom_call.1} parent=1 // pred_region
      %s413 = ssub.s32 32, 32
      %414 = vsyncadd [#allocation5], %s413
      %s416 = sshll.u32 [#allocation4], 4
      %s417 = int_to_ptr.vmem [resolvable:$true] %s416
      %419 = dma.vmem_to_hbm [thread:$0]  %s417, 32, %s10, [#allocation5]
    $region41: #{tpu_custom_call.1} parent=1 // pred_fallthru
      _
    // Predicated region
    $region42: #{tpu_custom_call.1} parent=1 // pred_check
      _
    $region43: #{tpu_custom_call.1} parent=1 // pred_check_branch
      %421 = sbr.rel (0) target = $region45
    $region44: #{tpu_custom_call.1} parent=1 // pred_region
      %422 = dma.done [#allocation5], 32
    $region45: #{tpu_custom_call.1} parent=1 // pred_fallthru
      _
    %423 = vsyncpa [#allocation5], 1

</llo_original>
